<compile_context>
chip_gen: v6e
topology: v6e:2x2x1
jax: 0.10.0
libtpu: 0.0.40
codegen_flags: <defaults>
</compile_context>

<pallas_src>
import functools

import jax
import jax.numpy as jnp
from jax.experimental import pallas as pl
from jax.experimental.pallas import tpu as pltpu

IN_DIM = 28 * 28   # 784
H1 = 128
H2 = 64
H2_PAD = 128       # zero-padded middle width (full 128-lane tiles)
OUT = 10
OUT_PAD = 128      # zero-padded output width (lane-dense stores)

MAX_TB = 512       # batch tile cap: 2 x (512*784*2B) ~ 1.6 MiB double-buffered x


def _round_up(n, m):
    return ((n + m - 1) // m) * m


def mlp_kernel(x_ref, w1_ref, b1_ref, w2_ref, b2_ref, w3_ref, b3_ref, o_ref):
    # x tile: (TB, 784) bf16; weights bf16; biases f32; accumulation in f32.
    x = x_ref[...]
    h1 = jnp.dot(x, w1_ref[...], preferred_element_type=jnp.float32)
    h1 = jnp.maximum(h1 + b1_ref[...], 0.0)                           # (TB, 128) f32

    h2 = jnp.dot(h1.astype(jnp.bfloat16), w2_ref[...],
                 preferred_element_type=jnp.float32)
    h2 = jnp.maximum(h2 + b2_ref[...], 0.0)                           # (TB, 128) f32

    h3 = jnp.dot(h2.astype(jnp.bfloat16), w3_ref[...],
                 preferred_element_type=jnp.float32)
    o_ref[...] = (h3 + b3_ref[...]).astype(o_ref.dtype)               # (TB, 128) f32


@jax.jit
def torch_example_basic_forward(x, params):
    """x: any shape flattening to (B, 784). Returns (B, 10) float32."""
    w1, b1, w2, b2, w3, b3 = params
    x2d = x.reshape(-1, IN_DIM)
    B = x2d.shape[0]

    # Batch tile: multiple of 16 (bf16 sublane packing), capped at MAX_TB.
    TB = min(MAX_TB, _round_up(B, 16))
    B_pad = _round_up(B, TB)
    grid = (B_pad // TB,)

    # bf16 streamed activations; pad ragged batch with zero rows (sliced off later).
    x_bf = x2d.astype(jnp.bfloat16)
    if B_pad != B:
        x_bf = jnp.pad(x_bf, ((0, B_pad - B), (0, 0)))

    # Zero-pad H2 and OUT to 128 lanes (mathematically exact).
    w1b = w1.astype(jnp.bfloat16)                                                   # (784, 128)
    w2b = jnp.pad(w2, ((0, 0), (0, H2_PAD - H2))).astype(jnp.bfloat16)              # (128, 128)
    w3b = jnp.pad(w3, ((0, H2_PAD - H2), (0, OUT_PAD - OUT))).astype(jnp.bfloat16)  # (128, 128)
    b1f = b1.astype(jnp.float32)                                                    # (1, 128)
    b2f = jnp.pad(b2, ((0, 0), (0, H2_PAD - H2))).astype(jnp.float32)               # (1, 128)
    b3f = jnp.pad(b3, ((0, 0), (0, OUT_PAD - OUT))).astype(jnp.float32)             # (1, 128)

    def resident(shape):
        # Same block for every grid step -> DMA'd once, stays VMEM-resident.
        return pl.BlockSpec(shape, lambda i: (0, 0))

    flops = 2 * B_pad * (IN_DIM * H1 + H1 * H2_PAD + H2_PAD * OUT_PAD)
    bytes_accessed = (
        B_pad * IN_DIM * 2                                # streamed x (bf16)
        + B_pad * OUT_PAD * 4                             # output (f32)
        + (w1b.size + w2b.size + w3b.size) * 2            # resident weights (bf16)
        + (b1f.size + b2f.size + b3f.size) * 4            # resident biases (f32)
    )

    out_pad = pl.pallas_call(
        mlp_kernel,
        out_shape=jax.ShapeDtypeStruct((B_pad, OUT_PAD), jnp.float32),
        grid=grid,
        in_specs=[
            pl.BlockSpec((TB, IN_DIM), lambda i: (i, 0)),   # streamed x tile
            resident((IN_DIM, H1)),                         # w1
            resident((1, H1)),                              # b1
            resident((H1, H2_PAD)),                         # w2 (padded)
            resident((1, H2_PAD)),                          # b2 (padded)
            resident((H2_PAD, OUT_PAD)),                    # w3 (padded)
            resident((1, OUT_PAD)),                         # b3 (padded)
        ],
        out_specs=pl.BlockSpec((TB, OUT_PAD), lambda i: (i, 0)),
        compiler_params=pltpu.CompilerParams(
            dimension_semantics=("parallel",)),             # megacore on v7x
        cost_estimate=pl.CostEstimate(
            flops=flops, transcendentals=0, bytes_accessed=bytes_accessed),
    )(x_bf, w1b, b1f, w2b, b2f, w3b, b3f)

    # Slice off batch padding and the zero-padded output lanes.
    return out_pad[:B, :OUT]


def init_params(key):
    """Deterministic init mimicking PyTorch nn.Linear default (uniform +/- 1/sqrt(fan_in))."""
    def linear(key, fan_in, fan_out):
        kw, kb = jax.random.split(key)
        bound = 1.0 / jnp.sqrt(fan_in)
        # stored as (in, out) so kernel does x @ W
        w = jax.random.uniform(kw, (fan_in, fan_out), jnp.float32, -bound, bound)
        b = jax.random.uniform(kb, (1, fan_out), jnp.float32, -bound, bound)
        return w, b

    k1, k2, k3 = jax.random.split(key, 3)
    w1, b1 = linear(k1, IN_DIM, H1)
    w2, b2 = linear(k2, H1, H2)
    w3, b3 = linear(k3, H2, OUT)
    return (w1, b1, w2, b2, w3, b3)


if __name__ == "__main__":
    key = jax.random.PRNGKey(0)
    k_param, k_x = jax.random.split(key)

    params = init_params(k_param)
    # small batch of MNIST-like inputs (B, 1, 28, 28)
    x = jax.random.normal(k_x, (8, 1, 28, 28), jnp.float32)

    out = torch_example_basic_forward(x, params)
    out = jax.block_until_ready(out)

    # Reference with the same bf16-input / f32-accumulation numerics as the kernel.
    w1, b1, w2, b2, w3, b3 = params
    xr = x.reshape(-1, IN_DIM).astype(jnp.bfloat16)
    ref = jnp.maximum(
        jnp.dot(xr, w1.astype(jnp.bfloat16), preferred_element_type=jnp.float32) + b1, 0.0)
    ref = jnp.maximum(
        jnp.dot(ref.astype(jnp.bfloat16), w2.astype(jnp.bfloat16),
                preferred_element_type=jnp.float32) + b2, 0.0)
    ref = jnp.dot(ref.astype(jnp.bfloat16), w3.astype(jnp.bfloat16),
                  preferred_element_type=jnp.float32) + b3

    assert out.shape == (8, OUT)
    assert jnp.allclose(out, ref, atol=1e-3, rtol=1e-3), (
        float(jnp.max(jnp.abs(out - ref))))

    print("KERNEL_OK")
</pallas_src>

<mosaic_0001>
module attributes {stable_mosaic.version = 11 : i64} {
  func.func @mlp_kernel(%arg0: i32, %arg1: memref<16x784xbf16, #tpu.memory_space<vmem>>, %arg2: memref<784x128xbf16, #tpu.memory_space<vmem>>, %arg3: memref<1x128xf32, #tpu.memory_space<vmem>>, %arg4: memref<128x128xbf16, #tpu.memory_space<vmem>>, %arg5: memref<1x128xf32, #tpu.memory_space<vmem>>, %arg6: memref<128x128xbf16, #tpu.memory_space<vmem>>, %arg7: memref<1x128xf32, #tpu.memory_space<vmem>>, %arg8: memref<16x128xf32, #tpu.memory_space<vmem>>) attributes {dimension_semantics = [#tpu.dimension_semantics<parallel>], iteration_bounds = array<i64: 1>, scalar_prefetch = 0 : i64, scratch_operands = 0 : i64, tpu.core_type = #tpu.core_type<tc>, window_params = [{transform_indices = @transform_0, window_bounds = array<i64: 16, 784>}, {pipeline_mode = #tpu.pipeline_mode<synchronous>, transform_indices = @transform_1, window_bounds = array<i64: 784, 128>}, {pipeline_mode = #tpu.pipeline_mode<synchronous>, transform_indices = @transform_2, window_bounds = array<i64: 1, 128>}, {pipeline_mode = #tpu.pipeline_mode<synchronous>, transform_indices = @transform_3, window_bounds = array<i64: 128, 128>}, {pipeline_mode = #tpu.pipeline_mode<synchronous>, transform_indices = @transform_4, window_bounds = array<i64: 1, 128>}, {pipeline_mode = #tpu.pipeline_mode<synchronous>, transform_indices = @transform_5, window_bounds = array<i64: 128, 128>}, {pipeline_mode = #tpu.pipeline_mode<synchronous>, transform_indices = @transform_6, window_bounds = array<i64: 1, 128>}, {transform_indices = @transform_7, window_bounds = array<i64: 16, 128>}]} {
    %c0 = arith.constant 0 : index
    %c0_0 = arith.constant 0 : index
    %0 = vector.load %arg1[%c0, %c0_0] : memref<16x784xbf16, #tpu.memory_space<vmem>>, vector<16x784xbf16>
    %c0_1 = arith.constant 0 : index
    %c0_2 = arith.constant 0 : index
    %1 = vector.load %arg2[%c0_1, %c0_2] : memref<784x128xbf16, #tpu.memory_space<vmem>>, vector<784x128xbf16>
    %cst = arith.constant dense<0.000000e+00> : vector<16x128xf32>
    %2 = tpu.matmul %0, %1, %cst {dimension_numbers = #tpu.dot_dimension_numbers<[1], [0], [0], [1], [0, 0, 1, 1], [], []>} : vector<16x784xbf16>, vector<784x128xbf16>, vector<16x128xf32> -> vector<16x128xf32>
    %c0_3 = arith.constant 0 : index
    %c0_4 = arith.constant 0 : index
    %3 = vector.load %arg3[%c0_3, %c0_4] : memref<1x128xf32, #tpu.memory_space<vmem>>, vector<1x128xf32>
    %4 = vector.broadcast %3 : vector<1x128xf32> to vector<16x128xf32>
    %5 = arith.addf %2, %4 : vector<16x128xf32>
    %cst_5 = arith.constant 0.000000e+00 : f32
    %6 = vector.broadcast %cst_5 : f32 to vector<16x128xf32>
    %7 = arith.maximumf %5, %6 : vector<16x128xf32>
    %8 = arith.truncf %7 : vector<16x128xf32> to vector<16x128xbf16>
    %c0_6 = arith.constant 0 : index
    %c0_7 = arith.constant 0 : index
    %9 = vector.load %arg4[%c0_6, %c0_7] : memref<128x128xbf16, #tpu.memory_space<vmem>>, vector<128x128xbf16>
    %cst_8 = arith.constant dense<0.000000e+00> : vector<16x128xf32>
    %10 = tpu.matmul %8, %9, %cst_8 {dimension_numbers = #tpu.dot_dimension_numbers<[1], [0], [0], [1], [0, 0, 1, 1], [], []>} : vector<16x128xbf16>, vector<128x128xbf16>, vector<16x128xf32> -> vector<16x128xf32>
    %c0_9 = arith.constant 0 : index
    %c0_10 = arith.constant 0 : index
    %11 = vector.load %arg5[%c0_9, %c0_10] : memref<1x128xf32, #tpu.memory_space<vmem>>, vector<1x128xf32>
    %12 = vector.broadcast %11 : vector<1x128xf32> to vector<16x128xf32>
    %13 = arith.addf %10, %12 : vector<16x128xf32>
    %cst_11 = arith.constant 0.000000e+00 : f32
    %14 = vector.broadcast %cst_11 : f32 to vector<16x128xf32>
    %15 = arith.maximumf %13, %14 : vector<16x128xf32>
    %16 = arith.truncf %15 : vector<16x128xf32> to vector<16x128xbf16>
    %c0_12 = arith.constant 0 : index
    %c0_13 = arith.constant 0 : index
    %17 = vector.load %arg6[%c0_12, %c0_13] : memref<128x128xbf16, #tpu.memory_space<vmem>>, vector<128x128xbf16>
    %cst_14 = arith.constant dense<0.000000e+00> : vector<16x128xf32>
    %18 = tpu.matmul %16, %17, %cst_14 {dimension_numbers = #tpu.dot_dimension_numbers<[1], [0], [0], [1], [0, 0, 1, 1], [], []>} : vector<16x128xbf16>, vector<128x128xbf16>, vector<16x128xf32> -> vector<16x128xf32>
    %c0_15 = arith.constant 0 : index
    %c0_16 = arith.constant 0 : index
    %19 = vector.load %arg7[%c0_15, %c0_16] : memref<1x128xf32, #tpu.memory_space<vmem>>, vector<1x128xf32>
    %20 = vector.broadcast %19 : vector<1x128xf32> to vector<16x128xf32>
    %21 = arith.addf %18, %20 : vector<16x128xf32>
    %c0_17 = arith.constant 0 : index
    %c0_18 = arith.constant 0 : index
    %22 = vector.load %arg8[%c0_17, %c0_18] : memref<16x128xf32, #tpu.memory_space<vmem>>, vector<16x128xf32>
    tpu.vector_store %arg8[%c0_17, %c0_18], %21 {strides = array<i32>} : memref<16x128xf32, #tpu.memory_space<vmem>>, vector<16x128xf32>,
    return
  }
  func.func @transform_0(%arg0: i32) -> (i32, i32) {
    %c0_i32 = arith.constant 0 : i32
    %c0_i32_0 = arith.constant 0 : i32
    return %arg0, %c0_i32 : i32, i32
  }
  func.func @transform_1(%arg0: i32) -> (i32, i32) {
    %c0_i32 = arith.constant 0 : i32
    %c0_i32_0 = arith.constant 0 : i32
    %c0_i32_1 = arith.constant 0 : i32
    return %c0_i32, %c0_i32_0 : i32, i32
  }
  func.func @transform_2(%arg0: i32) -> (i32, i32) {
    %c0_i32 = arith.constant 0 : i32
    %c0_i32_0 = arith.constant 0 : i32
    %c0_i32_1 = arith.constant 0 : i32
    return %c0_i32, %c0_i32_0 : i32, i32
  }
  func.func @transform_3(%arg0: i32) -> (i32, i32) {
    %c0_i32 = arith.constant 0 : i32
    %c0_i32_0 = arith.constant 0 : i32
    %c0_i32_1 = arith.constant 0 : i32
    return %c0_i32, %c0_i32_0 : i32, i32
  }
  func.func @transform_4(%arg0: i32) -> (i32, i32) {
    %c0_i32 = arith.constant 0 : i32
    %c0_i32_0 = arith.constant 0 : i32
    %c0_i32_1 = arith.constant 0 : i32
    return %c0_i32, %c0_i32_0 : i32, i32
  }
  func.func @transform_5(%arg0: i32) -> (i32, i32) {
    %c0_i32 = arith.constant 0 : i32
    %c0_i32_0 = arith.constant 0 : i32
    %c0_i32_1 = arith.constant 0 : i32
    return %c0_i32, %c0_i32_0 : i32, i32
  }
  func.func @transform_6(%arg0: i32) -> (i32, i32) {
    %c0_i32 = arith.constant 0 : i32
    %c0_i32_0 = arith.constant 0 : i32
    %c0_i32_1 = arith.constant 0 : i32
    return %c0_i32, %c0_i32_0 : i32, i32
  }
  func.func @transform_7(%arg0: i32) -> (i32, i32) {
    %c0_i32 = arith.constant 0 : i32
    %c0_i32_0 = arith.constant 0 : i32
    return %arg0, %c0_i32 : i32, i32
  }
}

</mosaic_0001>

<llo_original>
// kernel: torch_example_basic_forward.1
$region0: #{torch_example_basic_forward.1}
  #allocation0 [shape = 'u32[]', space=smem, size = 0x4, offset = 0x4, fixed_abs, tag = 'smem constant byte address 0x4 - core index']
  #allocation1 [shape = 'u32[144,128]{1,0:T(1,128)}', space=vmem, size = 0x12000, scoped, tag = 'internal scratch']
  %s0 = inlined_call_operand.vmem [shape: bf16[16,784], index: 0, kind: input, shape index: {}]
  %s1 = inlined_call_operand.vmem [shape: bf16[784,128], index: 1, kind: input, shape index: {}]
  %s2 = inlined_call_operand.vmem [shape: f32[1,128], index: 2, kind: input, shape index: {}]
  %s3 = inlined_call_operand.vmem [shape: bf16[128,128], index: 3, kind: input, shape index: {}]
  %s4 = inlined_call_operand.vmem [shape: f32[1,128], index: 4, kind: input, shape index: {}]
  %s5 = inlined_call_operand.vmem [shape: bf16[128,128], index: 5, kind: input, shape index: {}]
  %s6 = inlined_call_operand.vmem [shape: f32[1,128], index: 6, kind: input, shape index: {}]
  %s7 = inlined_call_operand.vmem [shape: f32[16,128], index: 7, kind: output, shape index: {}]
  %s8 = sld [smem:[#allocation0]]
  $region38: #{torch_example_basic_forward.1} parent=0
    _
  %s10 = ssub.s32 1, %s8
  %s11 = scalar_select 0, %s10, %s8
  // Predicated region
  $region2: #{torch_example_basic_forward.1} parent=0 // pred_check
    _
  $region3: #{torch_example_basic_forward.1} parent=0 // pred_check_branch
    %13 = sbr.rel (0) target = $region5
  $region4: #{torch_example_basic_forward.1} parent=0 // pred_region
    _
  $region5: #{torch_example_basic_forward.1} parent=0 // pred_fallthru
    _
  // Predicated region
  $region6: #{torch_example_basic_forward.1} parent=0 // pred_check
    _
  $region7: #{torch_example_basic_forward.1} parent=0 // pred_check_branch
    %15 = sbr.rel (0) target = $region9
  $region8: #{torch_example_basic_forward.1} parent=0 // pred_region
    _
  $region9: #{torch_example_basic_forward.1} parent=0 // pred_fallthru
    _
  // Predicated region
  $region10: #{torch_example_basic_forward.1} parent=0 // pred_check
    _
  $region11: #{torch_example_basic_forward.1} parent=0 // pred_check_branch
    %17 = sbr.rel (0) target = $region13
  $region12: #{torch_example_basic_forward.1} parent=0 // pred_region
    _
  $region13: #{torch_example_basic_forward.1} parent=0 // pred_fallthru
    _
  // Predicated region
  $region14: #{torch_example_basic_forward.1} parent=0 // pred_check
    _
  $region15: #{torch_example_basic_forward.1} parent=0 // pred_check_branch
    %19 = sbr.rel (0) target = $region17
  $region16: #{torch_example_basic_forward.1} parent=0 // pred_region
    _
  $region17: #{torch_example_basic_forward.1} parent=0 // pred_fallthru
    _
  // Predicated region
  $region18: #{torch_example_basic_forward.1} parent=0 // pred_check
    _
  $region19: #{torch_example_basic_forward.1} parent=0 // pred_check_branch
    %21 = sbr.rel (0) target = $region21
  $region20: #{torch_example_basic_forward.1} parent=0 // pred_region
    _
  $region21: #{torch_example_basic_forward.1} parent=0 // pred_fallthru
    _
  // Predicated region
  $region22: #{torch_example_basic_forward.1} parent=0 // pred_check
    _
  $region23: #{torch_example_basic_forward.1} parent=0 // pred_check_branch
    %23 = sbr.rel (0) target = $region25
  $region24: #{torch_example_basic_forward.1} parent=0 // pred_region
    _
  $region25: #{torch_example_basic_forward.1} parent=0 // pred_fallthru
    _
  // Predicated region
  $region26: #{torch_example_basic_forward.1} parent=0 // pred_check
    _
  $region27: #{torch_example_basic_forward.1} parent=0 // pred_check_branch
    %25 = sbr.rel (0) target = $region29
  $region28: #{torch_example_basic_forward.1} parent=0 // pred_region
    _
  $region29: #{torch_example_basic_forward.1} parent=0 // pred_fallthru
    _
  %v27 = vld [vmem:[%s0] sm:$0xff]
  %v28 = vld [vmem:[%s0 + $0x8] sm:$0xff]
  %v29 = vld [vmem:[%s0 + $0x10] sm:$0xff]
  %v30 = vld [vmem:[%s0 + $0x18] sm:$0xf]
  %v31 = vld [vmem:[%s0 + $0x1c] sm:$0xff]
  %v32 = vld [vmem:[%s0 + $0x24] sm:$0xff]
  %v33 = vld [vmem:[%s0 + $0x2c] sm:$0xff]
  %v34 = vld [vmem:[%s0 + $0x34] sm:$0xf]
  %v35 = vld [vmem:[%s1] sm:$0xf]
  %v36 = vld [vmem:[%s1 + $0x4] sm:$0xf]
  %v37 = vld [vmem:[%s1 + $0x8] sm:$0xf]
  %v38 = vld [vmem:[%s1 + $0xc] sm:$0xf]
  %v39 = vld [vmem:[%s1 + $0x10] sm:$0xf]
  %v40 = vld [vmem:[%s1 + $0x14] sm:$0xf]
  %v41 = vld [vmem:[%s1 + $0x18] sm:$0xf]
  %v42 = vld [vmem:[%s1 + $0x1c] sm:$0xf]
  %v43 = vld [vmem:[%s1 + $0x20] sm:$0xf]
  %v44 = vld [vmem:[%s1 + $0x24] sm:$0xf]
  %v45 = vld [vmem:[%s1 + $0x28] sm:$0xf]
  %v46 = vld [vmem:[%s1 + $0x2c] sm:$0xf]
  %v47 = vld [vmem:[%s1 + $0x30] sm:$0xf]
  %v48 = vld [vmem:[%s1 + $0x34] sm:$0xf]
  %v49 = vld [vmem:[%s1 + $0x38] sm:$0xf]
  %v50 = vld [vmem:[%s1 + $0x3c] sm:$0xf]
  %v51 = vld [vmem:[%s1 + $0x40] sm:$0xf]
  %v52 = vld [vmem:[%s1 + $0x44] sm:$0xf]
  %v53 = vld [vmem:[%s1 + $0x48] sm:$0xf]
  %v54 = vld [vmem:[%s1 + $0x4c] sm:$0xf]
  %v55 = vld [vmem:[%s1 + $0x50] sm:$0xf]
  %v56 = vld [vmem:[%s1 + $0x54] sm:$0xf]
  %v57 = vld [vmem:[%s1 + $0x58] sm:$0xf]
  %v58 = vld [vmem:[%s1 + $0x5c] sm:$0xf]
  %v59 = vld [vmem:[%s1 + $0x60] sm:$0xf]
  %v60 = vld [vmem:[%s1 + $0x64] sm:$0xf]
  %v61 = vld [vmem:[%s1 + $0x68] sm:$0xf]
  %v62 = vld [vmem:[%s1 + $0x6c] sm:$0xf]
  %v63 = vld [vmem:[%s1 + $0x70] sm:$0xf]
  %v64 = vld [vmem:[%s1 + $0x74] sm:$0xf]
  %v65 = vld [vmem:[%s1 + $0x78] sm:$0xf]
  %v66 = vld [vmem:[%s1 + $0x7c] sm:$0xf]
  %v67 = vld [vmem:[%s1 + $0x80] sm:$0xf]
  %v68 = vld [vmem:[%s1 + $0x84] sm:$0xf]
  %v69 = vld [vmem:[%s1 + $0x88] sm:$0xf]
  %v70 = vld [vmem:[%s1 + $0x8c] sm:$0xf]
  %v71 = vld [vmem:[%s1 + $0x90] sm:$0xf]
  %v72 = vld [vmem:[%s1 + $0x94] sm:$0xf]
  %v73 = vld [vmem:[%s1 + $0x98] sm:$0xf]
  %v74 = vld [vmem:[%s1 + $0x9c] sm:$0xf]
  %v75 = vld [vmem:[%s1 + $0xa0] sm:$0xf]
  %v76 = vld [vmem:[%s1 + $0xa4] sm:$0xf]
  %v77 = vld [vmem:[%s1 + $0xa8] sm:$0xf]
  %v78 = vld [vmem:[%s1 + $0xac] sm:$0xf]
  %v79 = vld [vmem:[%s1 + $0xb0] sm:$0xf]
  %v80 = vld [vmem:[%s1 + $0xb4] sm:$0xf]
  %v81 = vld [vmem:[%s1 + $0xb8] sm:$0xf]
  %v82 = vld [vmem:[%s1 + $0xbc] sm:$0xf]
  %v83 = vld [vmem:[%s1 + $0xc0] sm:$0xf]
  %v84 = vld [vmem:[%s1 + $0xc4] sm:$0xf]
  %v85 = vld [vmem:[%s1 + $0xc8] sm:$0xf]
  %v86 = vld [vmem:[%s1 + $0xcc] sm:$0xf]
  %v87 = vld [vmem:[%s1 + $0xd0] sm:$0xf]
  %v88 = vld [vmem:[%s1 + $0xd4] sm:$0xf]
  %v89 = vld [vmem:[%s1 + $0xd8] sm:$0xf]
  %v90 = vld [vmem:[%s1 + $0xdc] sm:$0xf]
  %v91 = vld [vmem:[%s1 + $0xe0] sm:$0xf]
  %v92 = vld [vmem:[%s1 + $0xe4] sm:$0xf]
  %v93 = vld [vmem:[%s1 + $0xe8] sm:$0xf]
  %v94 = vld [vmem:[%s1 + $0xec] sm:$0xf]
  %v95 = vld [vmem:[%s1 + $0xf0] sm:$0xf]
  %v96 = vld [vmem:[%s1 + $0xf4] sm:$0xf]
  %v97 = vld [vmem:[%s1 + $0xf8] sm:$0xf]
  %v98 = vld [vmem:[%s1 + $0xfc] sm:$0xf]
  %v99 = vld [vmem:[%s1 + $0x100] sm:$0xf]
  %v100 = vld [vmem:[%s1 + $0x104] sm:$0xf]
  %v101 = vld [vmem:[%s1 + $0x108] sm:$0xf]
  %v102 = vld [vmem:[%s1 + $0x10c] sm:$0xf]
  %v103 = vld [vmem:[%s1 + $0x110] sm:$0xf]
  %v104 = vld [vmem:[%s1 + $0x114] sm:$0xf]
  %v105 = vld [vmem:[%s1 + $0x118] sm:$0xf]
  %v106 = vld [vmem:[%s1 + $0x11c] sm:$0xf]
  %v107 = vld [vmem:[%s1 + $0x120] sm:$0xf]
  %v108 = vld [vmem:[%s1 + $0x124] sm:$0xf]
  %v109 = vld [vmem:[%s1 + $0x128] sm:$0xf]
  %v110 = vld [vmem:[%s1 + $0x12c] sm:$0xf]
  %v111 = vld [vmem:[%s1 + $0x130] sm:$0xf]
  %v112 = vld [vmem:[%s1 + $0x134] sm:$0xf]
  %v113 = vld [vmem:[%s1 + $0x138] sm:$0xf]
  %v114 = vld [vmem:[%s1 + $0x13c] sm:$0xf]
  %v115 = vld [vmem:[%s1 + $0x140] sm:$0xf]
  %v116 = vld [vmem:[%s1 + $0x144] sm:$0xf]
  %v117 = vld [vmem:[%s1 + $0x148] sm:$0xf]
  %v118 = vld [vmem:[%s1 + $0x14c] sm:$0xf]
  %v119 = vld [vmem:[%s1 + $0x150] sm:$0xf]
  %v120 = vld [vmem:[%s1 + $0x154] sm:$0xf]
  %v121 = vld [vmem:[%s1 + $0x158] sm:$0xf]
  %v122 = vld [vmem:[%s1 + $0x15c] sm:$0xf]
  %v123 = vld [vmem:[%s1 + $0x160] sm:$0xf]
  %v124 = vld [vmem:[%s1 + $0x164] sm:$0xf]
  %v125 = vld [vmem:[%s1 + $0x168] sm:$0xf]
  %v126 = vld [vmem:[%s1 + $0x16c] sm:$0xf]
  %v127 = vld [vmem:[%s1 + $0x170] sm:$0xf]
  %v128 = vld [vmem:[%s1 + $0x174] sm:$0xf]
  %v129 = vld [vmem:[%s1 + $0x178] sm:$0xf]
  %v130 = vld [vmem:[%s1 + $0x17c] sm:$0xf]
  %v131 = vld [vmem:[%s1 + $0x180] sm:$0xf]
  %v132 = vld [vmem:[%s1 + $0x184] sm:$0xf]
  %v133 = vld [vmem:[%s2] sm:$0x1]
  %v135 = vlaneseq
  %v136 = vshrl.u32 %v135, 7
  %v137 = vsub.s32 0, %v136
  %v138 = vrot.slane %v133, %v137
  %v148 = vunpack.c.l.b16 %v27
  %v149 = vunpack.c.h.b16 %v27
  %v150 = vunpack.c.l.b16 %v28
  %v151 = vunpack.c.h.b16 %v28
  %v152 = vunpack.c.l.b16 %v29
  %v153 = vunpack.c.h.b16 %v29
  %v154 = vunpack.c.l.b16 %v30
  %v155 = vunpack.c.l.b16 %v31
  %v156 = vunpack.c.h.b16 %v31
  %v157 = vunpack.c.l.b16 %v32
  %v158 = vunpack.c.h.b16 %v32
  %v159 = vunpack.c.l.b16 %v33
  %v160 = vunpack.c.h.b16 %v33
  %v161 = vunpack.c.l.b16 %v34
  %v162 = vpack.c.b16 %v155, %v148
  %v163 = vpack.c.b16 %v156, %v149
  %v164 = vpack.c.b16 %v157, %v150
  %v165 = vpack.c.b16 %v158, %v151
  %v166 = vpack.c.b16 %v159, %v152
  %v167 = vpack.c.b16 %v160, %v153
  %v168 = vpack.c.b16 %v161, %v154
  %v273 = vunpack.c.l.b16 %v35
  %v274 = vunpack.c.l.b16 %v36
  %v275 = vunpack.c.l.b16 %v37
  %v276 = vunpack.c.l.b16 %v38
  %v277 = vunpack.c.l.b16 %v39
  %v278 = vunpack.c.l.b16 %v40
  %v279 = vunpack.c.l.b16 %v41
  %v280 = vunpack.c.l.b16 %v42
  %v281 = vunpack.c.l.b16 %v43
  %v282 = vunpack.c.l.b16 %v44
  %v283 = vunpack.c.l.b16 %v45
  %v284 = vunpack.c.l.b16 %v46
  %v285 = vunpack.c.l.b16 %v47
  %v286 = vunpack.c.l.b16 %v48
  %v287 = vunpack.c.l.b16 %v49
  %v288 = vunpack.c.l.b16 %v50
  %v289 = vunpack.c.l.b16 %v51
  %v290 = vunpack.c.l.b16 %v52
  %v291 = vunpack.c.l.b16 %v53
  %v292 = vunpack.c.l.b16 %v54
  %v293 = vunpack.c.l.b16 %v55
  %v294 = vunpack.c.l.b16 %v56
  %v295 = vunpack.c.l.b16 %v57
  %v296 = vunpack.c.l.b16 %v58
  %v297 = vunpack.c.l.b16 %v59
  %v298 = vunpack.c.l.b16 %v60
  %v299 = vunpack.c.l.b16 %v61
  %v300 = vunpack.c.l.b16 %v62
  %v301 = vunpack.c.l.b16 %v63
  %v302 = vunpack.c.l.b16 %v64
  %v303 = vunpack.c.l.b16 %v65
  %v304 = vunpack.c.l.b16 %v66
  %v305 = vunpack.c.l.b16 %v67
  %v306 = vunpack.c.l.b16 %v68
  %v307 = vunpack.c.l.b16 %v69
  %v308 = vunpack.c.l.b16 %v70
  %v309 = vunpack.c.l.b16 %v71
  %v310 = vunpack.c.l.b16 %v72
  %v311 = vunpack.c.l.b16 %v73
  %v312 = vunpack.c.l.b16 %v74
  %v313 = vunpack.c.l.b16 %v75
  %v314 = vunpack.c.l.b16 %v76
  %v315 = vunpack.c.l.b16 %v77
  %v316 = vunpack.c.l.b16 %v78
  %v317 = vunpack.c.l.b16 %v79
  %v318 = vunpack.c.l.b16 %v80
  %v319 = vunpack.c.l.b16 %v81
  %v320 = vunpack.c.l.b16 %v82
  %v321 = vunpack.c.l.b16 %v83
  %v322 = vunpack.c.l.b16 %v84
  %v323 = vunpack.c.l.b16 %v85
  %v324 = vunpack.c.l.b16 %v86
  %v325 = vunpack.c.l.b16 %v87
  %v326 = vunpack.c.l.b16 %v88
  %v327 = vunpack.c.l.b16 %v89
  %v328 = vunpack.c.l.b16 %v90
  %v329 = vunpack.c.l.b16 %v91
  %v330 = vunpack.c.l.b16 %v92
  %v331 = vunpack.c.l.b16 %v93
  %v332 = vunpack.c.l.b16 %v94
  %v333 = vunpack.c.l.b16 %v95
  %v334 = vunpack.c.l.b16 %v96
  %v335 = vunpack.c.l.b16 %v97
  %v336 = vunpack.c.l.b16 %v98
  %v337 = vunpack.c.l.b16 %v99
  %v338 = vunpack.c.l.b16 %v100
  %v339 = vunpack.c.l.b16 %v101
  %v340 = vunpack.c.l.b16 %v102
  %v341 = vunpack.c.l.b16 %v103
  %v342 = vunpack.c.l.b16 %v104
  %v343 = vunpack.c.l.b16 %v105
  %v344 = vunpack.c.l.b16 %v106
  %v345 = vunpack.c.l.b16 %v107
  %v346 = vunpack.c.l.b16 %v108
  %v347 = vunpack.c.l.b16 %v109
  %v348 = vunpack.c.l.b16 %v110
  %v349 = vunpack.c.l.b16 %v111
  %v350 = vunpack.c.l.b16 %v112
  %v351 = vunpack.c.l.b16 %v113
  %v352 = vunpack.c.l.b16 %v114
  %v353 = vunpack.c.l.b16 %v115
  %v354 = vunpack.c.l.b16 %v116
  %v355 = vunpack.c.l.b16 %v117
  %v356 = vunpack.c.l.b16 %v118
  %v357 = vunpack.c.l.b16 %v119
  %v358 = vunpack.c.l.b16 %v120
  %v359 = vunpack.c.l.b16 %v121
  %v360 = vunpack.c.l.b16 %v122
  %v361 = vunpack.c.l.b16 %v123
  %v362 = vunpack.c.l.b16 %v124
  %v363 = vunpack.c.l.b16 %v125
  %v364 = vunpack.c.l.b16 %v126
  %v365 = vunpack.c.l.b16 %v127
  %v366 = vunpack.c.l.b16 %v128
  %v367 = vunpack.c.l.b16 %v129
  %v368 = vunpack.c.l.b16 %v130
  %v369 = vunpack.c.l.b16 %v131
  %v370 = vunpack.c.l.b16 %v132
  %v371 = vpack.c.b16 %v274, %v273
  %v372 = vpack.c.b16 %v276, %v275
  %v373 = vpack.c.b16 %v278, %v277
  %v374 = vpack.c.b16 %v280, %v279
  %v375 = vpack.c.b16 %v282, %v281
  %v376 = vpack.c.b16 %v284, %v283
  %v377 = vpack.c.b16 %v286, %v285
  %v378 = vpack.c.b16 %v288, %v287
  %v379 = vpack.c.b16 %v290, %v289
  %v380 = vpack.c.b16 %v292, %v291
  %v381 = vpack.c.b16 %v294, %v293
  %v382 = vpack.c.b16 %v296, %v295
  %v383 = vpack.c.b16 %v298, %v297
  %v384 = vpack.c.b16 %v300, %v299
  %v385 = vpack.c.b16 %v302, %v301
  %v386 = vpack.c.b16 %v304, %v303
  %v387 = vpack.c.b16 %v306, %v305
  %v388 = vpack.c.b16 %v308, %v307
  %v389 = vpack.c.b16 %v310, %v309
  %v390 = vpack.c.b16 %v312, %v311
  %v391 = vpack.c.b16 %v314, %v313
  %v392 = vpack.c.b16 %v316, %v315
  %v393 = vpack.c.b16 %v318, %v317
  %v394 = vpack.c.b16 %v320, %v319
  %v395 = vpack.c.b16 %v322, %v321
  %v396 = vpack.c.b16 %v324, %v323
  %v397 = vpack.c.b16 %v326, %v325
  %v398 = vpack.c.b16 %v328, %v327
  %v399 = vpack.c.b16 %v330, %v329
  %v400 = vpack.c.b16 %v332, %v331
  %v401 = vpack.c.b16 %v334, %v333
  %v402 = vpack.c.b16 %v336, %v335
  %v403 = vpack.c.b16 %v338, %v337
  %v404 = vpack.c.b16 %v340, %v339
  %v405 = vpack.c.b16 %v342, %v341
  %v406 = vpack.c.b16 %v344, %v343
  %v407 = vpack.c.b16 %v346, %v345
  %v408 = vpack.c.b16 %v348, %v347
  %v409 = vpack.c.b16 %v350, %v349
  %v410 = vpack.c.b16 %v352, %v351
  %v411 = vpack.c.b16 %v354, %v353
  %v412 = vpack.c.b16 %v356, %v355
  %v413 = vpack.c.b16 %v358, %v357
  %v414 = vpack.c.b16 %v360, %v359
  %v415 = vpack.c.b16 %v362, %v361
  %v416 = vpack.c.b16 %v364, %v363
  %v417 = vpack.c.b16 %v366, %v365
  %v418 = vpack.c.b16 %v368, %v367
  %v419 = vpack.c.b16 %v370, %v369
  %vm469 = vcmask 130048
  %v471 = vsel %vm469, %v168, 0
  %473 = vmatprep.subr.bf16.mxu0 0
  %474 = vmatpush1.bf16.msra.mxu0 %v378
  %475 = vmatprep.subr.bf16.mxu0 0
  %476 = vmatpush1.bf16.msra.mxu0 %v377
  %477 = vmatprep.subr.bf16.mxu0 0
  %478 = vmatpush1.bf16.msra.mxu0 %v376
  %479 = vmatprep.subr.bf16.mxu0 0
  %480 = vmatpush1.bf16.msra.mxu0 %v375
  %481 = vmatprep.subr.bf16.mxu0 0
  %482 = vmatpush1.bf16.msra.mxu0 %v374
  %483 = vmatprep.subr.bf16.mxu0 0
  %484 = vmatpush1.bf16.msra.mxu0 %v373
  %485 = vmatprep.subr.bf16.mxu0 0
  %486 = vmatpush1.bf16.msra.mxu0 %v372
  %487 = vmatprep.subr.bf16.mxu0 0
  %488 = vmatpush1.bf16.msra.mxu0 %v371
  %489 = vmatprep.subr.bf16.mxu0 0
  %490 = vmatpush2.bf16.msra.mxu0 %v386
  %491 = vmatprep.subr.bf16.mxu0 0
  %492 = vmatpush2.bf16.msra.mxu0 %v385
  %493 = vmatprep.subr.bf16.mxu0 0
  %494 = vmatpush2.bf16.msra.mxu0 %v384
  %495 = vmatprep.subr.bf16.mxu0 0
  %496 = vmatpush2.bf16.msra.mxu0 %v383
  %497 = vmatprep.subr.bf16.mxu0 0
  %498 = vmatpush2.bf16.msra.mxu0 %v382
  %499 = vmatprep.subr.bf16.mxu0 0
  %500 = vmatpush2.bf16.msra.mxu0 %v381
  %501 = vmatprep.subr.bf16.mxu0 0
  %502 = vmatpush2.bf16.msra.mxu0 %v380
  %503 = vmatprep.subr.bf16.mxu0 0
  %504 = vmatpush2.bf16.msra.mxu0 %v379
  %505 = vmatprep.mubr.bf16.mxu0 %v163
  %506 = vmatmul.mubr.bf16.gmra.mxu0 %v162
  %v507 = vpop.f32.mrf.mxu0
  %v508 = vadd.f32 %v138, %v507
  %v509 = vpop.f32.mrf.mxu0
  %v510 = vpop.f32.mrf.mxu0
  %v511 = vadd.f32 %v138, %v510
  %v512 = vpop.f32.mrf.mxu0
  %513 = vdwg.mxu0
  %514 = vmatprep.subr.bf16.mxu0 0
  %515 = vmatpush1.bf16.msra.mxu0 %v394
  %516 = vmatprep.subr.bf16.mxu0 0
  %517 = vmatpush1.bf16.msra.mxu0 %v393
  %518 = vmatprep.subr.bf16.mxu0 0
  %519 = vmatpush1.bf16.msra.mxu0 %v392
  %520 = vmatprep.subr.bf16.mxu0 0
  %521 = vmatpush1.bf16.msra.mxu0 %v391
  %522 = vmatprep.subr.bf16.mxu0 0
  %523 = vmatpush1.bf16.msra.mxu0 %v390
  %524 = vmatprep.subr.bf16.mxu0 0
  %525 = vmatpush1.bf16.msra.mxu0 %v389
  %526 = vmatprep.subr.bf16.mxu0 0
  %527 = vmatpush1.bf16.msra.mxu0 %v388
  %528 = vmatprep.subr.bf16.mxu0 0
  %529 = vmatpush1.bf16.msra.mxu0 %v387
  %530 = vmatprep.subr.bf16.mxu0 0
  %531 = vmatpush2.bf16.msra.mxu0 %v402
  %532 = vmatprep.subr.bf16.mxu0 0
  %533 = vmatpush2.bf16.msra.mxu0 %v401
  %534 = vmatprep.subr.bf16.mxu0 0
  %535 = vmatpush2.bf16.msra.mxu0 %v400
  %536 = vmatprep.subr.bf16.mxu0 0
  %537 = vmatpush2.bf16.msra.mxu0 %v399
  %538 = vmatprep.subr.bf16.mxu0 0
  %539 = vmatpush2.bf16.msra.mxu0 %v398
  %540 = vmatprep.subr.bf16.mxu0 0
  %541 = vmatpush2.bf16.msra.mxu0 %v397
  %542 = vmatprep.subr.bf16.mxu0 0
  %543 = vmatpush2.bf16.msra.mxu0 %v396
  %544 = vmatprep.subr.bf16.mxu0 0
  %545 = vmatpush2.bf16.msra.mxu0 %v395
  %546 = vmatprep.mubr.bf16.mxu0 %v165
  %547 = vmatmul.mubr.bf16.gmra.mxu0 %v164
  %v548 = vpop.f32.mrf.mxu0
  %v549 = vadd.f32 %v508, %v548
  %v550 = vpop.f32.mrf.mxu0
  %v551 = vpop.f32.mrf.mxu0
  %v552 = vadd.f32 %v511, %v551
  %v553 = vpop.f32.mrf.mxu0
  %554 = vdwg.mxu0
  %555 = vmatprep.subr.bf16.mxu0 0
  %556 = vmatpush1.bf16.msra.mxu0 %v410
  %557 = vmatprep.subr.bf16.mxu0 0
  %558 = vmatpush1.bf16.msra.mxu0 %v409
  %559 = vmatprep.subr.bf16.mxu0 0
  %560 = vmatpush1.bf16.msra.mxu0 %v408
  %561 = vmatprep.subr.bf16.mxu0 0
  %562 = vmatpush1.bf16.msra.mxu0 %v407
  %563 = vmatprep.subr.bf16.mxu0 0
  %564 = vmatpush1.bf16.msra.mxu0 %v406
  %565 = vmatprep.subr.bf16.mxu0 0
  %566 = vmatpush1.bf16.msra.mxu0 %v405
  %567 = vmatprep.subr.bf16.mxu0 0
  %568 = vmatpush1.bf16.msra.mxu0 %v404
  %569 = vmatprep.subr.bf16.mxu0 0
  %570 = vmatpush1.bf16.msra.mxu0 %v403
  %571 = vmatprep.subr.bf16.mxu0 0
  %572 = vmatpush2.bf16.msra.mxu0 %v418
  %573 = vmatprep.subr.bf16.mxu0 0
  %574 = vmatpush2.bf16.msra.mxu0 %v417
  %575 = vmatprep.subr.bf16.mxu0 0
  %576 = vmatpush2.bf16.msra.mxu0 %v416
  %577 = vmatprep.subr.bf16.mxu0 0
  %578 = vmatpush2.bf16.msra.mxu0 %v415
  %579 = vmatprep.subr.bf16.mxu0 0
  %580 = vmatpush2.bf16.msra.mxu0 %v414
  %581 = vmatprep.subr.bf16.mxu0 0
  %582 = vmatpush2.bf16.msra.mxu0 %v413
  %583 = vmatprep.subr.bf16.mxu0 0
  %584 = vmatpush2.bf16.msra.mxu0 %v412
  %585 = vmatprep.subr.bf16.mxu0 0
  %586 = vmatpush2.bf16.msra.mxu0 %v411
  %587 = vmatprep.mubr.bf16.mxu0 %v167
  %588 = vmatmul.mubr.bf16.gmra.mxu0 %v166
  %v589 = vpop.f32.mrf.mxu0
  %v590 = vadd.f32 %v549, %v589
  %v591 = vpop.f32.mrf.mxu0
  %v592 = vpop.f32.mrf.mxu0
  %v593 = vadd.f32 %v552, %v592
  %v594 = vpop.f32.mrf.mxu0
  %595 = vdwg.mxu0
  %596 = vmatprep.subr.bf16.mxu0 0
  %597 = vmatpush1.bf16.msra.mxu0 0
  %598 = vmatprep.subr.bf16.mxu0 0
  %599 = vmatpush1.bf16.msra.mxu0 0
  %600 = vmatprep.subr.bf16.mxu0 0
  %601 = vmatpush1.bf16.msra.mxu0 0
  %602 = vmatprep.subr.bf16.mxu0 0
  %603 = vmatpush1.bf16.msra.mxu0 0
  %604 = vmatprep.subr.bf16.mxu0 0
  %605 = vmatpush1.bf16.msra.mxu0 0
  %606 = vmatprep.subr.bf16.mxu0 0
  %607 = vmatpush1.bf16.msra.mxu0 0
  %608 = vmatprep.subr.bf16.mxu0 0
  %609 = vmatpush1.bf16.msra.mxu0 0
  %610 = vmatprep.subr.bf16.mxu0 0
  %611 = vmatpush1.bf16.msra.mxu0 %v419
  %612 = vmatprep.subr.bf16.mxu0 0
  %613 = vmatpush2.bf16.msra.mxu0 0
  %614 = vmatprep.subr.bf16.mxu0 0
  %615 = vmatpush2.bf16.msra.mxu0 0
  %616 = vmatprep.subr.bf16.mxu0 0
  %617 = vmatpush2.bf16.msra.mxu0 0
  %618 = vmatprep.subr.bf16.mxu0 0
  %619 = vmatpush2.bf16.msra.mxu0 0
  %620 = vmatprep.subr.bf16.mxu0 0
  %621 = vmatpush2.bf16.msra.mxu0 0
  %622 = vmatprep.subr.bf16.mxu0 0
  %623 = vmatpush2.bf16.msra.mxu0 0
  %624 = vmatprep.subr.bf16.mxu0 0
  %625 = vmatpush2.bf16.msra.mxu0 0
  %626 = vmatprep.subr.bf16.mxu0 0
  %627 = vmatpush2.bf16.msra.mxu0 0
  %628 = vmatprep.mubr.bf16.mxu0 0
  %629 = vmatmul.mubr.bf16.gmra.mxu0 %v471
  %v630 = vpop.f32.mrf.mxu0
  %v631 = vadd.f32 %v590, %v630
  %v632 = vpop.f32.mrf.mxu0
  %v633 = vpop.f32.mrf.mxu0
  %v634 = vadd.f32 %v593, %v633
  %v635 = vpop.f32.mrf.mxu0
  %636 = vdwg.mxu0
  %v637 = vmax.f32 %v631, 0.0
  %v638 = vmax.f32 %v634, 0.0
  %v639 = vpack.c.bf16 %v638, %v637
  %v640 = vld [vmem:[%s3] sm:$0xf]
  %v641 = vld [vmem:[%s3 + $0x4] sm:$0xf]
  %v642 = vld [vmem:[%s3 + $0x8] sm:$0xf]
  %v643 = vld [vmem:[%s3 + $0xc] sm:$0xf]
  %v644 = vld [vmem:[%s3 + $0x10] sm:$0xf]
  %v645 = vld [vmem:[%s3 + $0x14] sm:$0xf]
  %v646 = vld [vmem:[%s3 + $0x18] sm:$0xf]
  %v647 = vld [vmem:[%s3 + $0x1c] sm:$0xf]
  %v648 = vld [vmem:[%s3 + $0x20] sm:$0xf]
  %v649 = vld [vmem:[%s3 + $0x24] sm:$0xf]
  %v650 = vld [vmem:[%s3 + $0x28] sm:$0xf]
  %v651 = vld [vmem:[%s3 + $0x2c] sm:$0xf]
  %v652 = vld [vmem:[%s3 + $0x30] sm:$0xf]
  %v653 = vld [vmem:[%s3 + $0x34] sm:$0xf]
  %v654 = vld [vmem:[%s3 + $0x38] sm:$0xf]
  %v655 = vld [vmem:[%s3 + $0x3c] sm:$0xf]
  %v656 = vld [vmem:[%s4] sm:$0x1]
  %v658 = vlaneseq
  %v659 = vshrl.u32 %v658, 7
  %v660 = vsub.s32 0, %v659
  %v661 = vrot.slane %v656, %v660
  %v679 = vunpack.c.l.b16 %v640
  %v680 = vunpack.c.l.b16 %v641
  %v681 = vunpack.c.l.b16 %v642
  %v682 = vunpack.c.l.b16 %v643
  %v683 = vunpack.c.l.b16 %v644
  %v684 = vunpack.c.l.b16 %v645
  %v685 = vunpack.c.l.b16 %v646
  %v686 = vunpack.c.l.b16 %v647
  %v687 = vunpack.c.l.b16 %v648
  %v688 = vunpack.c.l.b16 %v649
  %v689 = vunpack.c.l.b16 %v650
  %v690 = vunpack.c.l.b16 %v651
  %v691 = vunpack.c.l.b16 %v652
  %v692 = vunpack.c.l.b16 %v653
  %v693 = vunpack.c.l.b16 %v654
  %v694 = vunpack.c.l.b16 %v655
  %v695 = vpack.c.b16 %v680, %v679
  %v696 = vpack.c.b16 %v682, %v681
  %v697 = vpack.c.b16 %v684, %v683
  %v698 = vpack.c.b16 %v686, %v685
  %v699 = vpack.c.b16 %v688, %v687
  %v700 = vpack.c.b16 %v690, %v689
  %v701 = vpack.c.b16 %v692, %v691
  %v702 = vpack.c.b16 %v694, %v693
  %711 = vmatprep.subr.bf16.mxu0 0
  %712 = vmatpush1.bf16.msra.mxu0 %v702
  %713 = vmatprep.subr.bf16.mxu0 0
  %714 = vmatpush1.bf16.msra.mxu0 %v701
  %715 = vmatprep.subr.bf16.mxu0 0
  %716 = vmatpush1.bf16.msra.mxu0 %v700
  %717 = vmatprep.subr.bf16.mxu0 0
  %718 = vmatpush1.bf16.msra.mxu0 %v699
  %719 = vmatprep.subr.bf16.mxu0 0
  %720 = vmatpush1.bf16.msra.mxu0 %v698
  %721 = vmatprep.subr.bf16.mxu0 0
  %722 = vmatpush1.bf16.msra.mxu0 %v697
  %723 = vmatprep.subr.bf16.mxu0 0
  %724 = vmatpush1.bf16.msra.mxu0 %v696
  %725 = vmatprep.subr.bf16.mxu0 0
  %726 = vmatpush1.bf16.msra.mxu0 %v695
  %727 = vmatprep.subr.bf16.mxu0 0
  %728 = vmatpush2.bf16.msra.mxu0 0
  %729 = vmatprep.subr.bf16.mxu0 0
  %730 = vmatpush2.bf16.msra.mxu0 0
  %731 = vmatprep.subr.bf16.mxu0 0
  %732 = vmatpush2.bf16.msra.mxu0 0
  %733 = vmatprep.subr.bf16.mxu0 0
  %734 = vmatpush2.bf16.msra.mxu0 0
  %735 = vmatprep.subr.bf16.mxu0 0
  %736 = vmatpush2.bf16.msra.mxu0 0
  %737 = vmatprep.subr.bf16.mxu0 0
  %738 = vmatpush2.bf16.msra.mxu0 0
  %739 = vmatprep.subr.bf16.mxu0 0
  %740 = vmatpush2.bf16.msra.mxu0 0
  %741 = vmatprep.subr.bf16.mxu0 0
  %742 = vmatpush2.bf16.msra.mxu0 0
  %743 = vmatprep.mubr.bf16.mxu0 0
  %744 = vmatmul.mubr.bf16.gmra.mxu0 %v639
  %v745 = vpop.f32.mrf.mxu0
  %v746 = vadd.f32 %v661, %v745
  %v747 = vpop.f32.mrf.mxu0
  %v748 = vpop.f32.mrf.mxu0
  %v749 = vadd.f32 %v661, %v748
  %v750 = vpop.f32.mrf.mxu0
  %751 = vdwg.mxu0
  %v752 = vmax.f32 %v746, 0.0
  %v753 = vmax.f32 %v749, 0.0
  %v754 = vpack.c.bf16 %v753, %v752
  %v755 = vld [vmem:[%s5] sm:$0xf]
  %v756 = vld [vmem:[%s5 + $0x4] sm:$0xf]
  %v757 = vld [vmem:[%s5 + $0x8] sm:$0xf]
  %v758 = vld [vmem:[%s5 + $0xc] sm:$0xf]
  %v759 = vld [vmem:[%s5 + $0x10] sm:$0xf]
  %v760 = vld [vmem:[%s5 + $0x14] sm:$0xf]
  %v761 = vld [vmem:[%s5 + $0x18] sm:$0xf]
  %v762 = vld [vmem:[%s5 + $0x1c] sm:$0xf]
  %v763 = vld [vmem:[%s5 + $0x20] sm:$0xf]
  %v764 = vld [vmem:[%s5 + $0x24] sm:$0xf]
  %v765 = vld [vmem:[%s5 + $0x28] sm:$0xf]
  %v766 = vld [vmem:[%s5 + $0x2c] sm:$0xf]
  %v767 = vld [vmem:[%s5 + $0x30] sm:$0xf]
  %v768 = vld [vmem:[%s5 + $0x34] sm:$0xf]
  %v769 = vld [vmem:[%s5 + $0x38] sm:$0xf]
  %v770 = vld [vmem:[%s5 + $0x3c] sm:$0xf]
  %v771 = vld [vmem:[%s6] sm:$0x1]
  %v773 = vlaneseq
  %v774 = vshrl.u32 %v773, 7
  %v775 = vsub.s32 0, %v774
  %v776 = vrot.slane %v771, %v775
  %v794 = vunpack.c.l.b16 %v755
  %v795 = vunpack.c.l.b16 %v756
  %v796 = vunpack.c.l.b16 %v757
  %v797 = vunpack.c.l.b16 %v758
  %v798 = vunpack.c.l.b16 %v759
  %v799 = vunpack.c.l.b16 %v760
  %v800 = vunpack.c.l.b16 %v761
  %v801 = vunpack.c.l.b16 %v762
  %v802 = vunpack.c.l.b16 %v763
  %v803 = vunpack.c.l.b16 %v764
  %v804 = vunpack.c.l.b16 %v765
  %v805 = vunpack.c.l.b16 %v766
  %v806 = vunpack.c.l.b16 %v767
  %v807 = vunpack.c.l.b16 %v768
  %v808 = vunpack.c.l.b16 %v769
  %v809 = vunpack.c.l.b16 %v770
  %v810 = vpack.c.b16 %v795, %v794
  %v811 = vpack.c.b16 %v797, %v796
  %v812 = vpack.c.b16 %v799, %v798
  %v813 = vpack.c.b16 %v801, %v800
  %v814 = vpack.c.b16 %v803, %v802
  %v815 = vpack.c.b16 %v805, %v804
  %v816 = vpack.c.b16 %v807, %v806
  %v817 = vpack.c.b16 %v809, %v808
  %826 = vmatprep.subr.bf16.mxu0 0
  %827 = vmatpush1.bf16.msra.mxu0 %v817
  %828 = vmatprep.subr.bf16.mxu0 0
  %829 = vmatpush1.bf16.msra.mxu0 %v816
  %830 = vmatprep.subr.bf16.mxu0 0
  %831 = vmatpush1.bf16.msra.mxu0 %v815
  %832 = vmatprep.subr.bf16.mxu0 0
  %833 = vmatpush1.bf16.msra.mxu0 %v814
  %834 = vmatprep.subr.bf16.mxu0 0
  %835 = vmatpush1.bf16.msra.mxu0 %v813
  %836 = vmatprep.subr.bf16.mxu0 0
  %837 = vmatpush1.bf16.msra.mxu0 %v812
  %838 = vmatprep.subr.bf16.mxu0 0
  %839 = vmatpush1.bf16.msra.mxu0 %v811
  %840 = vmatprep.subr.bf16.mxu0 0
  %841 = vmatpush1.bf16.msra.mxu0 %v810
  %842 = vmatprep.subr.bf16.mxu0 0
  %843 = vmatpush2.bf16.msra.mxu0 0
  %844 = vmatprep.subr.bf16.mxu0 0
  %845 = vmatpush2.bf16.msra.mxu0 0
  %846 = vmatprep.subr.bf16.mxu0 0
  %847 = vmatpush2.bf16.msra.mxu0 0
  %848 = vmatprep.subr.bf16.mxu0 0
  %849 = vmatpush2.bf16.msra.mxu0 0
  %850 = vmatprep.subr.bf16.mxu0 0
  %851 = vmatpush2.bf16.msra.mxu0 0
  %852 = vmatprep.subr.bf16.mxu0 0
  %853 = vmatpush2.bf16.msra.mxu0 0
  %854 = vmatprep.subr.bf16.mxu0 0
  %855 = vmatpush2.bf16.msra.mxu0 0
  %856 = vmatprep.subr.bf16.mxu0 0
  %857 = vmatpush2.bf16.msra.mxu0 0
  %858 = vmatprep.mubr.bf16.mxu0 0
  %859 = vmatmul.mubr.bf16.gmra.mxu0 %v754
  %v860 = vpop.f32.mrf.mxu0
  %v861 = vadd.f32 %v776, %v860
  %v862 = vpop.f32.mrf.mxu0
  %v863 = vpop.f32.mrf.mxu0
  %v864 = vadd.f32 %v776, %v863
  %v865 = vpop.f32.mrf.mxu0
  %866 = vdwg.mxu0
  %867 = vst [vmem:[%s7] sm:$0xff] %v861
  %868 = vst [vmem:[%s7 + $0x8] sm:$0xff] %v864
  // Predicated region
  $region30: #{torch_example_basic_forward.1} parent=0 // pred_check
    _
  $region31: #{torch_example_basic_forward.1} parent=0 // pred_check_branch
    %870 = sbr.rel (0) target = $region33
  $region32: #{torch_example_basic_forward.1} parent=0 // pred_region
    _
  $region33: #{torch_example_basic_forward.1} parent=0 // pred_fallthru
    _
  // Predicated region
  $region34: #{torch_example_basic_forward.1} parent=0 // pred_check
    _
  $region35: #{torch_example_basic_forward.1} parent=0 // pred_check_branch
    %872 = sbr.rel (0) target = $region37
  $region36: #{torch_example_basic_forward.1} parent=0 // pred_region
    _
  $region37: #{torch_example_basic_forward.1} parent=0 // pred_fallthru
    _

</llo_original>
